<compile_context>
chip_gen: v7x
topology: tpu7x:2x2x1
jax: 0.10.0
libtpu: 0.0.40
codegen_flags: <defaults>
</compile_context>

<pallas_src>
import functools

import jax
import jax.numpy as jnp
from jax.experimental import pallas as pl
from jax.experimental.pallas import tpu as pltpu

C_IN, C_H1, C_H2, C_OUT = 64, 128, 16, 2

_LANE = 128
_TARGET_TILE_BYTES = 8 << 20   # aim for ~8 MiB of x per grid step
_TL_CAP = 32768                # max L tile (8 MiB f32 x tile at C_IN=64)
_BN_CAP = 64                   # bound on the unrolled per-sample loop
_SMALL_L = 64                  # <= this -> flattened lane-dense path


def _ceil_to(x, m):
    return ((x + m - 1) // m) * m


def _collapse_params(params):
    # Valid ONLY because LinearNet is activation-free (fc1 -> fc2 -> fc3, no ReLU/BN).
    w1, b1, w2, b2, w3, b3 = params
    w_c = (w1 @ w2) @ w3                 # (64, 2)
    b_c = (b1 @ w2 + b2) @ w3 + b3       # (1, 2)
    return w_c, b_c


# ---------------------------------------------------------------------------
# Kernels
# ---------------------------------------------------------------------------
def _ncl_kernel(x_ref, w_ref, b_ref, o_ref, *, bn):
    # x_ref: (bn, 64, tl)  w_ref: (2, 64)  b_ref: (2, 1) f32  o_ref: (bn, 2, tl)
    w = w_ref[...]
    b = b_ref[...]
    for n in range(bn):                                    # static unroll, bn <= 64
        y = jnp.dot(w, x_ref[n], preferred_element_type=jnp.float32)   # (2, tl)
        o_ref[n] = (y + b).astype(o_ref.dtype)


def _flat_kernel(x_ref, w_ref, b_ref, o_ref):
    # x_ref: (bn, 64*L)  w_ref: (64*L, 2*L)  b_ref: (1, 2*L) f32  o_ref: (bn, 2*L)
    y = jnp.dot(x_ref[...], w_ref[...], preferred_element_type=jnp.float32)
    o_ref[...] = (y + b_ref[...]).astype(o_ref.dtype)


# ---------------------------------------------------------------------------
# Wrapper
# ---------------------------------------------------------------------------
def convnet_forward(sim, params, *, stream_dtype=None):
    """Fused LinearNet head on NCL data.

    sim: (N, 64, L).  Returns (N, 2, L) in sim.dtype.
    stream_dtype: optionally jnp.bfloat16 to halve the dominant HBM read
      (accumulation stays f32, output keeps sim.dtype).
    """
    N, C, L = sim.shape
    assert C == C_IN
    out_dtype = sim.dtype
    osz = jnp.dtype(out_dtype).itemsize

    w_c, b_c = _collapse_params(params)          # f32
    in_dtype = jnp.dtype(stream_dtype) if stream_dtype is not None else jnp.dtype(sim.dtype)
    isz = in_dtype.itemsize
    x_in = sim.astype(in_dtype)

    cost = pl.CostEstimate(
        flops=2 * N * L * C_IN * C_OUT,
        transcendentals=0,
        bytes_accessed=N * C_IN * L * isz + N * C_OUT * L * osz,
    )

    # ------------------------------------------------------------------ small L
    if L <= _SMALL_L:
        # Free reshape (N,64,L)->(N,64L); block-diagonal weight W_big = w_c ⊗ I_L so the
        # kernel is a single lane-dense (bn,64L)@(64L,2L) matmul per grid step.  This
        # avoids lane-sparse tiles / 64-byte DMA rows entirely for tiny L.
        k_dim = C_IN * L
        n_dim = C_OUT * L
        w_big = (w_c.astype(in_dtype)[:, None, :, None] *
                 jnp.eye(L, dtype=in_dtype)[None, :, None, :]).reshape(k_dim, n_dim)
        b_big = jnp.broadcast_to(b_c.reshape(C_OUT, 1).astype(jnp.float32),
                                 (C_OUT, L)).reshape(1, n_dim)

        bn = int(max(1, min(N, _TARGET_TILE_BYTES // (k_dim * isz))))
        if N >= 2:
            bn = min(bn, -(-N // 2))             # >=2 grid points for v7x megacore
        if bn < N:                               # 2-D block: sublane dim must be 8-aligned
            bn = max(8, (bn // 8) * 8)
            if bn >= N:
                bn = N
        grid = (pl.cdiv(N, bn),)

        k_pad = _ceil_to(k_dim, _LANE)
        n_pad = _ceil_to(n_dim, _LANE)
        bn_pad = _ceil_to(bn, 8)
        vmem = (2 * bn_pad * k_pad * isz + 2 * bn_pad * n_pad * osz +
                2 * k_pad * n_pad * isz + 2 * 8 * n_pad * 4 + (2 << 20))
        vmem = max(int(vmem), 16 << 20)

        out2 = pl.pallas_call(
            _flat_kernel,
            out_shape=jax.ShapeDtypeStruct((N, n_dim), out_dtype),
            grid_spec=pltpu.PrefetchScalarGridSpec(
                num_scalar_prefetch=0,
                grid=grid,
                in_specs=[
                    pl.BlockSpec((bn, k_dim), lambda i: (i, 0)),
                    pl.BlockSpec((k_dim, n_dim), lambda i: (0, 0)),
                    pl.BlockSpec((1, n_dim), lambda i: (0, 0)),
                ],
                out_specs=pl.BlockSpec((bn, n_dim), lambda i: (i, 0)),
            ),
            compiler_params=pltpu.CompilerParams(
                dimension_semantics=("parallel",),
                vmem_limit_bytes=vmem,
            ),
            cost_estimate=cost,
        )(x_in.reshape(N, k_dim), w_big, b_big)
        return out2.reshape(N, C_OUT, L)

    # ---------------------------------------------------------------- generic L
    wt = w_c.T.astype(in_dtype)                  # (2, 64)
    bt = b_c.T.astype(jnp.float32)               # (2, 1)

    tl = min(_ceil_to(L, _LANE), _TL_CAP)
    bn = int(max(1, min(_BN_CAP, N, _TARGET_TILE_BYTES // (C_IN * tl * isz))))
    if pl.cdiv(N, bn) * pl.cdiv(L, tl) < 2:      # keep v7x's 2nd TensorCore busy
        if N >= 2 and bn > 1:
            bn = -(-N // 2)
        elif _ceil_to(L, _LANE) >= 2 * _LANE:
            tl = _ceil_to(-(-L // 2), _LANE)
    grid = (pl.cdiv(N, bn), pl.cdiv(L, tl))

    vmem = 2 * bn * C_IN * tl * isz + 2 * bn * 8 * tl * osz + (2 << 20)
    vmem = max(int(vmem), 16 << 20)

    return pl.pallas_call(
        functools.partial(_ncl_kernel, bn=bn),
        out_shape=jax.ShapeDtypeStruct((N, C_OUT, L), out_dtype),
        grid_spec=pltpu.PrefetchScalarGridSpec(
            num_scalar_prefetch=0,
            grid=grid,
            in_specs=[
                pl.BlockSpec((bn, C_IN, tl), lambda i, j: (i, 0, j)),   # x tiles (NCL)
                pl.BlockSpec((C_OUT, C_IN), lambda i, j: (0, 0)),       # collapsed W^T
                pl.BlockSpec((C_OUT, 1), lambda i, j: (0, 0)),          # collapsed b^T
            ],
            out_specs=pl.BlockSpec((bn, C_OUT, tl), lambda i, j: (i, 0, j)),
        ),
        compiler_params=pltpu.CompilerParams(
            dimension_semantics=("parallel", "parallel"),
            vmem_limit_bytes=vmem,
        ),
        cost_estimate=cost,
    )(x_in, wt, bt)


# ---------------------------------------------------------------------------
# Reference / init / self-test
# ---------------------------------------------------------------------------
def init_params(key):
    """PyTorch-style uniform +/- 1/sqrt(fan_in) init. Weights (C_in, C_out), biases (1, C_out)."""
    ks = jax.random.split(key, 6)

    def uinit(k, shape, fan_in):
        bound = 1.0 / jnp.sqrt(fan_in)
        return jax.random.uniform(k, shape, jnp.float32, -bound, bound)

    w1 = uinit(ks[0], (C_IN, C_H1), C_IN)
    b1 = uinit(ks[1], (1, C_H1), C_IN)
    w2 = uinit(ks[2], (C_H1, C_H2), C_H1)
    b2 = uinit(ks[3], (1, C_H2), C_H1)
    w3 = uinit(ks[4], (C_H2, C_OUT), C_H2)
    b3 = uinit(ks[5], (1, C_OUT), C_H2)
    return (w1, b1, w2, b2, w3, b3)


def reference_forward(sim, params):
    """Pure-JAX reference: the original un-collapsed chain of three affine layers."""
    w1, b1, w2, b2, w3, b3 = params
    x = jnp.transpose(sim, (0, 2, 1))                       # (N, L, C)
    h = jnp.einsum("nlc,cd->nld", x, w1) + b1[0]
    h = jnp.einsum("nlc,cd->nld", h, w2) + b2[0]
    h = jnp.einsum("nlc,cd->nld", h, w3) + b3[0]
    return jnp.transpose(h, (0, 2, 1))                      # (N, 2, L)


if __name__ == "__main__":
    key = jax.random.PRNGKey(0)
    k1, k2, k3, k4, kp = jax.random.split(key, 5)
    params = init_params(kp)
    fwd = jax.jit(convnet_forward, static_argnames=("stream_dtype",))

    # 1) Small L (flattened / block-diagonal-weight path).
    sim_a = jax.random.normal(k1, (2, C_IN, 16), jnp.float32)
    out_a = jax.block_until_ready(fwd(sim_a, params))
    ref_a = reference_forward(sim_a, params)
    assert out_a.shape == (2, C_OUT, 16), out_a.shape
    assert jnp.allclose(out_a, ref_a, atol=1e-4, rtol=1e-4), "mismatch (small L)"

    # 2) Ragged L (generic path; grid split over L so a single-sample input still
    #    yields >=2 grid points, masked tail tile).
    sim_b = jax.random.normal(k2, (1, C_IN, 300), jnp.float32)
    out_b = jax.block_until_ready(fwd(sim_b, params))
    ref_b = reference_forward(sim_b, params)
    assert out_b.shape == (1, C_OUT, 300), out_b.shape
    assert jnp.allclose(out_b, ref_b, atol=1e-4, rtol=1e-4), "mismatch (ragged L)"

    # 3) Batched-n generic path (exercises the unrolled per-sample loop, bn > 1).
    sim_c = jax.random.normal(k3, (4, C_IN, 384), jnp.float32)
    out_c = jax.block_until_ready(fwd(sim_c, params))
    ref_c = reference_forward(sim_c, params)
    assert out_c.shape == (4, C_OUT, 384), out_c.shape
    assert jnp.allclose(out_c, ref_c, atol=1e-4, rtol=1e-4), "mismatch (batched n)"

    # 4) bf16-streamed input/weight (HBM-read-bound kernel -> ~2x traffic cut),
    #    f32 accumulation, f32 output; validated at bf16-appropriate tolerance.
    sim_d = jax.random.normal(k4, (2, C_IN, 640), jnp.float32)
    out_d = jax.block_until_ready(fwd(sim_d, params, stream_dtype=jnp.bfloat16))
    ref_d = reference_forward(sim_d, params)
    err = jnp.max(jnp.abs(out_d - ref_d))
    assert out_d.shape == (2, C_OUT, 640), out_d.shape
    assert err <= 2e-2 * (1.0 + jnp.max(jnp.abs(ref_d))), f"bf16 mismatch: {err}"

    print("KERNEL_OK")
</pallas_src>

<mosaic_0001>
module attributes {stable_mosaic.version = 11 : i64} {
  func.func @_flat_kernel(%arg0: i32, %arg1: memref<2x1024xf32, #tpu.memory_space<vmem>>, %arg2: memref<1024x32xf32, #tpu.memory_space<vmem>>, %arg3: memref<1x32xf32, #tpu.memory_space<vmem>>, %arg4: memref<2x32xf32, #tpu.memory_space<vmem>>) attributes {dimension_semantics = [#tpu.dimension_semantics<parallel>], iteration_bounds = array<i64: 1>, scalar_prefetch = 0 : i64, scratch_operands = 0 : i64, tpu.core_type = #tpu.core_type<tc>, window_params = [{transform_indices = @transform_0, window_bounds = array<i64: 2, 1024>}, {pipeline_mode = #tpu.pipeline_mode<synchronous>, transform_indices = @transform_1, window_bounds = array<i64: 1024, 32>}, {pipeline_mode = #tpu.pipeline_mode<synchronous>, transform_indices = @transform_2, window_bounds = array<i64: 1, 32>}, {transform_indices = @transform_3, window_bounds = array<i64: 2, 32>}]} {
    %c0 = arith.constant 0 : index
    %c0_0 = arith.constant 0 : index
    %0 = vector.load %arg1[%c0, %c0_0] : memref<2x1024xf32, #tpu.memory_space<vmem>>, vector<2x1024xf32>
    %c0_1 = arith.constant 0 : index
    %c0_2 = arith.constant 0 : index
    %1 = vector.load %arg2[%c0_1, %c0_2] : memref<1024x32xf32, #tpu.memory_space<vmem>>, vector<1024x32xf32>
    %cst = arith.constant dense<0.000000e+00> : vector<2x32xf32>
    %2 = tpu.matmul %0, %1, %cst {dimension_numbers = #tpu.dot_dimension_numbers<[1], [0], [0], [1], [0, 0, 1, 1], [], []>} : vector<2x1024xf32>, vector<1024x32xf32>, vector<2x32xf32> -> vector<2x32xf32>
    %c0_3 = arith.constant 0 : index
    %c0_4 = arith.constant 0 : index
    %3 = vector.load %arg3[%c0_3, %c0_4] : memref<1x32xf32, #tpu.memory_space<vmem>>, vector<1x32xf32>
    %4 = vector.broadcast %3 : vector<1x32xf32> to vector<2x32xf32>
    %5 = arith.addf %2, %4 : vector<2x32xf32>
    %c0_5 = arith.constant 0 : index
    %c0_6 = arith.constant 0 : index
    %6 = vector.load %arg4[%c0_5, %c0_6] : memref<2x32xf32, #tpu.memory_space<vmem>>, vector<2x32xf32>
    tpu.vector_store %arg4[%c0_5, %c0_6], %5 {strides = array<i32>} : memref<2x32xf32, #tpu.memory_space<vmem>>, vector<2x32xf32>,
    return
  }
  func.func @transform_0(%arg0: i32) -> (i32, i32) {
    %c0_i32 = arith.constant 0 : i32
    %c0_i32_0 = arith.constant 0 : i32
    return %arg0, %c0_i32 : i32, i32
  }
  func.func @transform_1(%arg0: i32) -> (i32, i32) {
    %c0_i32 = arith.constant 0 : i32
    %c0_i32_0 = arith.constant 0 : i32
    %c0_i32_1 = arith.constant 0 : i32
    return %c0_i32, %c0_i32_0 : i32, i32
  }
  func.func @transform_2(%arg0: i32) -> (i32, i32) {
    %c0_i32 = arith.constant 0 : i32
    %c0_i32_0 = arith.constant 0 : i32
    %c0_i32_1 = arith.constant 0 : i32
    return %c0_i32, %c0_i32_0 : i32, i32
  }
  func.func @transform_3(%arg0: i32) -> (i32, i32) {
    %c0_i32 = arith.constant 0 : i32
    %c0_i32_0 = arith.constant 0 : i32
    return %arg0, %c0_i32 : i32, i32
  }
}

</mosaic_0001>

<llo_original>
// kernel: convnet_forward.1
$region0: #{convnet_forward.1}
  #allocation0 [shape = 'u32[]', space=smem, size = 0x4, offset = 0x4, fixed_abs, tag = 'smem constant byte address 0x4 - core index']
  #allocation1 [shape = 'u32[144,128]{1,0:T(1,128)}', space=vmem, size = 0x12000, scoped, tag = 'internal scratch']
  %s0 = inlined_call_operand.vmem [shape: f32[2,1024], index: 0, kind: input, shape index: {}]
  %s1 = inlined_call_operand.vmem [shape: f32[1024,32], index: 1, kind: input, shape index: {}]
  %s2 = inlined_call_operand.vmem [shape: f32[1,32], index: 2, kind: input, shape index: {}]
  %s3 = inlined_call_operand.vmem [shape: f32[2,32], index: 3, kind: output, shape index: {}]
  %s4 = sld [smem:[#allocation0]]
  $region22: #{convnet_forward.1} parent=0
    _
  %s6 = ssub.s32 1, %s4
  %s7 = scalar_select 0, %s6, %s4
  // Predicated region
  $region2: #{convnet_forward.1} parent=0 // pred_check
    _
  $region3: #{convnet_forward.1} parent=0 // pred_check_branch
    %9 = sbr.rel (0) target = $region5
  $region4: #{convnet_forward.1} parent=0 // pred_region
    _
  $region5: #{convnet_forward.1} parent=0 // pred_fallthru
    _
  // Predicated region
  $region6: #{convnet_forward.1} parent=0 // pred_check
    _
  $region7: #{convnet_forward.1} parent=0 // pred_check_branch
    %11 = sbr.rel (0) target = $region9
  $region8: #{convnet_forward.1} parent=0 // pred_region
    _
  $region9: #{convnet_forward.1} parent=0 // pred_fallthru
    _
  // Predicated region
  $region10: #{convnet_forward.1} parent=0 // pred_check
    _
  $region11: #{convnet_forward.1} parent=0 // pred_check_branch
    %13 = sbr.rel (0) target = $region13
  $region12: #{convnet_forward.1} parent=0 // pred_region
    _
  $region13: #{convnet_forward.1} parent=0 // pred_fallthru
    _
  %v14 = vld [vmem:[%s0] sm:$0xff]
  %v15 = vld [vmem:[%s0 + $0x8] sm:$0xff]
  %v16 = vld [vmem:[%s1] sm:$0xff]
  %v17 = vld [vmem:[%s1 + $0x8] sm:$0xff]
  %v18 = vld [vmem:[%s1 + $0x10] sm:$0xff]
  %v19 = vld [vmem:[%s1 + $0x18] sm:$0xff]
  %v20 = vld [vmem:[%s1 + $0x20] sm:$0xff]
  %v21 = vld [vmem:[%s1 + $0x28] sm:$0xff]
  %v22 = vld [vmem:[%s1 + $0x30] sm:$0xff]
  %v23 = vld [vmem:[%s1 + $0x38] sm:$0xff]
  %v24 = vld [vmem:[%s1 + $0x40] sm:$0xff]
  %v25 = vld [vmem:[%s1 + $0x48] sm:$0xff]
  %v26 = vld [vmem:[%s1 + $0x50] sm:$0xff]
  %v27 = vld [vmem:[%s1 + $0x58] sm:$0xff]
  %v28 = vld [vmem:[%s1 + $0x60] sm:$0xff]
  %v29 = vld [vmem:[%s1 + $0x68] sm:$0xff]
  %v30 = vld [vmem:[%s1 + $0x70] sm:$0xff]
  %v31 = vld [vmem:[%s1 + $0x78] sm:$0xff]
  %v32 = vld [vmem:[%s1 + $0x80] sm:$0xff]
  %v33 = vld [vmem:[%s1 + $0x88] sm:$0xff]
  %v34 = vld [vmem:[%s1 + $0x90] sm:$0xff]
  %v35 = vld [vmem:[%s1 + $0x98] sm:$0xff]
  %v36 = vld [vmem:[%s1 + $0xa0] sm:$0xff]
  %v37 = vld [vmem:[%s1 + $0xa8] sm:$0xff]
  %v38 = vld [vmem:[%s1 + $0xb0] sm:$0xff]
  %v39 = vld [vmem:[%s1 + $0xb8] sm:$0xff]
  %v40 = vld [vmem:[%s1 + $0xc0] sm:$0xff]
  %v41 = vld [vmem:[%s1 + $0xc8] sm:$0xff]
  %v42 = vld [vmem:[%s1 + $0xd0] sm:$0xff]
  %v43 = vld [vmem:[%s1 + $0xd8] sm:$0xff]
  %v44 = vld [vmem:[%s1 + $0xe0] sm:$0xff]
  %v45 = vld [vmem:[%s1 + $0xe8] sm:$0xff]
  %v46 = vld [vmem:[%s1 + $0xf0] sm:$0xff]
  %v47 = vld [vmem:[%s1 + $0xf8] sm:$0xff]
  %v48 = vld [vmem:[%s1 + $0x100] sm:$0xff]
  %v49 = vld [vmem:[%s1 + $0x108] sm:$0xff]
  %v50 = vld [vmem:[%s1 + $0x110] sm:$0xff]
  %v51 = vld [vmem:[%s1 + $0x118] sm:$0xff]
  %v52 = vld [vmem:[%s1 + $0x120] sm:$0xff]
  %v53 = vld [vmem:[%s1 + $0x128] sm:$0xff]
  %v54 = vld [vmem:[%s1 + $0x130] sm:$0xff]
  %v55 = vld [vmem:[%s1 + $0x138] sm:$0xff]
  %v56 = vld [vmem:[%s1 + $0x140] sm:$0xff]
  %v57 = vld [vmem:[%s1 + $0x148] sm:$0xff]
  %v58 = vld [vmem:[%s1 + $0x150] sm:$0xff]
  %v59 = vld [vmem:[%s1 + $0x158] sm:$0xff]
  %v60 = vld [vmem:[%s1 + $0x160] sm:$0xff]
  %v61 = vld [vmem:[%s1 + $0x168] sm:$0xff]
  %v62 = vld [vmem:[%s1 + $0x170] sm:$0xff]
  %v63 = vld [vmem:[%s1 + $0x178] sm:$0xff]
  %v64 = vld [vmem:[%s1 + $0x180] sm:$0xff]
  %v65 = vld [vmem:[%s1 + $0x188] sm:$0xff]
  %v66 = vld [vmem:[%s1 + $0x190] sm:$0xff]
  %v67 = vld [vmem:[%s1 + $0x198] sm:$0xff]
  %v68 = vld [vmem:[%s1 + $0x1a0] sm:$0xff]
  %v69 = vld [vmem:[%s1 + $0x1a8] sm:$0xff]
  %v70 = vld [vmem:[%s1 + $0x1b0] sm:$0xff]
  %v71 = vld [vmem:[%s1 + $0x1b8] sm:$0xff]
  %v72 = vld [vmem:[%s1 + $0x1c0] sm:$0xff]
  %v73 = vld [vmem:[%s1 + $0x1c8] sm:$0xff]
  %v74 = vld [vmem:[%s1 + $0x1d0] sm:$0xff]
  %v75 = vld [vmem:[%s1 + $0x1d8] sm:$0xff]
  %v76 = vld [vmem:[%s1 + $0x1e0] sm:$0xff]
  %v77 = vld [vmem:[%s1 + $0x1e8] sm:$0xff]
  %v78 = vld [vmem:[%s1 + $0x1f0] sm:$0xff]
  %v79 = vld [vmem:[%s1 + $0x1f8] sm:$0xff]
  %v80 = vld [vmem:[%s1 + $0x200] sm:$0xff]
  %v81 = vld [vmem:[%s1 + $0x208] sm:$0xff]
  %v82 = vld [vmem:[%s1 + $0x210] sm:$0xff]
  %v83 = vld [vmem:[%s1 + $0x218] sm:$0xff]
  %v84 = vld [vmem:[%s1 + $0x220] sm:$0xff]
  %v85 = vld [vmem:[%s1 + $0x228] sm:$0xff]
  %v86 = vld [vmem:[%s1 + $0x230] sm:$0xff]
  %v87 = vld [vmem:[%s1 + $0x238] sm:$0xff]
  %v88 = vld [vmem:[%s1 + $0x240] sm:$0xff]
  %v89 = vld [vmem:[%s1 + $0x248] sm:$0xff]
  %v90 = vld [vmem:[%s1 + $0x250] sm:$0xff]
  %v91 = vld [vmem:[%s1 + $0x258] sm:$0xff]
  %v92 = vld [vmem:[%s1 + $0x260] sm:$0xff]
  %v93 = vld [vmem:[%s1 + $0x268] sm:$0xff]
  %v94 = vld [vmem:[%s1 + $0x270] sm:$0xff]
  %v95 = vld [vmem:[%s1 + $0x278] sm:$0xff]
  %v96 = vld [vmem:[%s1 + $0x280] sm:$0xff]
  %v97 = vld [vmem:[%s1 + $0x288] sm:$0xff]
  %v98 = vld [vmem:[%s1 + $0x290] sm:$0xff]
  %v99 = vld [vmem:[%s1 + $0x298] sm:$0xff]
  %v100 = vld [vmem:[%s1 + $0x2a0] sm:$0xff]
  %v101 = vld [vmem:[%s1 + $0x2a8] sm:$0xff]
  %v102 = vld [vmem:[%s1 + $0x2b0] sm:$0xff]
  %v103 = vld [vmem:[%s1 + $0x2b8] sm:$0xff]
  %v104 = vld [vmem:[%s1 + $0x2c0] sm:$0xff]
  %v105 = vld [vmem:[%s1 + $0x2c8] sm:$0xff]
  %v106 = vld [vmem:[%s1 + $0x2d0] sm:$0xff]
  %v107 = vld [vmem:[%s1 + $0x2d8] sm:$0xff]
  %v108 = vld [vmem:[%s1 + $0x2e0] sm:$0xff]
  %v109 = vld [vmem:[%s1 + $0x2e8] sm:$0xff]
  %v110 = vld [vmem:[%s1 + $0x2f0] sm:$0xff]
  %v111 = vld [vmem:[%s1 + $0x2f8] sm:$0xff]
  %v112 = vld [vmem:[%s1 + $0x300] sm:$0xff]
  %v113 = vld [vmem:[%s1 + $0x308] sm:$0xff]
  %v114 = vld [vmem:[%s1 + $0x310] sm:$0xff]
  %v115 = vld [vmem:[%s1 + $0x318] sm:$0xff]
  %v116 = vld [vmem:[%s1 + $0x320] sm:$0xff]
  %v117 = vld [vmem:[%s1 + $0x328] sm:$0xff]
  %v118 = vld [vmem:[%s1 + $0x330] sm:$0xff]
  %v119 = vld [vmem:[%s1 + $0x338] sm:$0xff]
  %v120 = vld [vmem:[%s1 + $0x340] sm:$0xff]
  %v121 = vld [vmem:[%s1 + $0x348] sm:$0xff]
  %v122 = vld [vmem:[%s1 + $0x350] sm:$0xff]
  %v123 = vld [vmem:[%s1 + $0x358] sm:$0xff]
  %v124 = vld [vmem:[%s1 + $0x360] sm:$0xff]
  %v125 = vld [vmem:[%s1 + $0x368] sm:$0xff]
  %v126 = vld [vmem:[%s1 + $0x370] sm:$0xff]
  %v127 = vld [vmem:[%s1 + $0x378] sm:$0xff]
  %v128 = vld [vmem:[%s1 + $0x380] sm:$0xff]
  %v129 = vld [vmem:[%s1 + $0x388] sm:$0xff]
  %v130 = vld [vmem:[%s1 + $0x390] sm:$0xff]
  %v131 = vld [vmem:[%s1 + $0x398] sm:$0xff]
  %v132 = vld [vmem:[%s1 + $0x3a0] sm:$0xff]
  %v133 = vld [vmem:[%s1 + $0x3a8] sm:$0xff]
  %v134 = vld [vmem:[%s1 + $0x3b0] sm:$0xff]
  %v135 = vld [vmem:[%s1 + $0x3b8] sm:$0xff]
  %v136 = vld [vmem:[%s1 + $0x3c0] sm:$0xff]
  %v137 = vld [vmem:[%s1 + $0x3c8] sm:$0xff]
  %v138 = vld [vmem:[%s1 + $0x3d0] sm:$0xff]
  %v139 = vld [vmem:[%s1 + $0x3d8] sm:$0xff]
  %v140 = vld [vmem:[%s1 + $0x3e0] sm:$0xff]
  %v141 = vld [vmem:[%s1 + $0x3e8] sm:$0xff]
  %v142 = vld [vmem:[%s1 + $0x3f0] sm:$0xff]
  %v143 = vld [vmem:[%s1 + $0x3f8] sm:$0xff]
  %v144 = vld [vmem:[%s2] sm:$0x1]
  %v146 = vlaneseq
  %v147 = vshrl.u32 %v146, 7
  %v148 = vsub.s32 0, %v147
  %v149 = vrot.slane %v144, %v148
  %v153 = vcombine.high %v14, %v14
  %v155 = vunpack.c.l.s4 1983009808
  %v156 = vunpack.c.0.s8 %v155
  %v157 = vlaneseq
  %v158 = vshrl.u32 %v157, 7
  %v159 = vsub.s32 %v156, %v158
  %v160 = vrot.slane %v14, %v159
  %v162 = vunpack.c.l.s4 1983009808
  %v163 = vunpack.c.0.s8 %v162
  %v164 = vlaneseq
  %v165 = vshrl.u32 %v164, 7
  %v166 = vsub.s32 %v163, %v165
  %v167 = vrot.slane %v153, %v166
  %v168 = vcombine.high %v160, %v160
  %v169 = vcombine.high %v167, %v167
  %v170 = vcombine.high %v15, %v15
  %v172 = vunpack.c.l.s4 1983009808
  %v173 = vunpack.c.0.s8 %v172
  %v174 = vlaneseq
  %v175 = vshrl.u32 %v174, 7
  %v176 = vsub.s32 %v173, %v175
  %v177 = vrot.slane %v15, %v176
  %v179 = vunpack.c.l.s4 1983009808
  %v180 = vunpack.c.0.s8 %v179
  %v181 = vlaneseq
  %v182 = vshrl.u32 %v181, 7
  %v183 = vsub.s32 %v180, %v182
  %v184 = vrot.slane %v170, %v183
  %v185 = vcombine.high %v177, %v177
  %v186 = vcombine.high %v184, %v184
  %195 = vmatprep.subr.mxu0 0.0
  %196 = vmatpush1.msra.mxu0 %v16
  %197 = vmatprep.subr.mxu0 0.0
  %198 = vmatpush1.msra.mxu0 %v17
  %199 = vmatprep.subr.mxu0 0.0
  %200 = vmatpush1.msra.mxu0 %v18
  %201 = vmatprep.subr.mxu0 0.0
  %202 = vmatpush1.msra.mxu0 %v19
  %203 = vmatprep.subr.mxu0 0.0
  %204 = vmatpush1.msra.mxu0 %v20
  %205 = vmatprep.subr.mxu0 0.0
  %206 = vmatpush1.msra.mxu0 %v21
  %207 = vmatprep.subr.mxu0 0.0
  %208 = vmatpush1.msra.mxu0 %v22
  %209 = vmatprep.subr.mxu0 0.0
  %210 = vmatpush1.msra.mxu0 %v23
  %211 = vmatprep.subr.mxu0 0.0
  %212 = vmatpush1.msra.mxu0 %v24
  %213 = vmatprep.subr.mxu0 0.0
  %214 = vmatpush1.msra.mxu0 %v25
  %215 = vmatprep.subr.mxu0 0.0
  %216 = vmatpush1.msra.mxu0 %v26
  %217 = vmatprep.subr.mxu0 0.0
  %218 = vmatpush1.msra.mxu0 %v27
  %219 = vmatprep.subr.mxu0 0.0
  %220 = vmatpush1.msra.mxu0 %v28
  %221 = vmatprep.subr.mxu0 0.0
  %222 = vmatpush1.msra.mxu0 %v29
  %223 = vmatprep.subr.mxu0 0.0
  %224 = vmatpush1.msra.mxu0 %v30
  %225 = vmatprep.subr.mxu0 0.0
  %226 = vmatpush1.msra.mxu0 %v31
  %227 = vmatprep.subr.mxu0 0.0
  %228 = vmatpush1.msra.mxu0 %v32
  %229 = vmatprep.subr.mxu0 0.0
  %230 = vmatpush1.msra.mxu0 %v33
  %231 = vmatprep.subr.mxu0 0.0
  %232 = vmatpush1.msra.mxu0 %v34
  %233 = vmatprep.subr.mxu0 0.0
  %234 = vmatpush1.msra.mxu0 %v35
  %235 = vmatprep.subr.mxu0 0.0
  %236 = vmatpush1.msra.mxu0 %v36
  %237 = vmatprep.subr.mxu0 0.0
  %238 = vmatpush1.msra.mxu0 %v37
  %239 = vmatprep.subr.mxu0 0.0
  %240 = vmatpush1.msra.mxu0 %v38
  %241 = vmatprep.subr.mxu0 0.0
  %242 = vmatpush1.msra.mxu0 %v39
  %243 = vmatprep.subr.mxu0 0.0
  %244 = vmatpush1.msra.mxu0 %v40
  %245 = vmatprep.subr.mxu0 0.0
  %246 = vmatpush1.msra.mxu0 %v41
  %247 = vmatprep.subr.mxu0 0.0
  %248 = vmatpush1.msra.mxu0 %v42
  %249 = vmatprep.subr.mxu0 0.0
  %250 = vmatpush1.msra.mxu0 %v43
  %251 = vmatprep.subr.mxu0 0.0
  %252 = vmatpush1.msra.mxu0 %v44
  %253 = vmatprep.subr.mxu0 0.0
  %254 = vmatpush1.msra.mxu0 %v45
  %255 = vmatprep.subr.mxu0 0.0
  %256 = vmatpush1.msra.mxu0 %v46
  %257 = vmatprep.subr.mxu0 0.0
  %258 = vmatpush1.msra.mxu0 %v47
  %259 = vmatprep.mubr.f32.mxu0 %v168
  %260 = vmatmul.mubr.f32.gmra.mrb[0].mxu0 %v160
  %v261 = vpop.f32.mrb[0].mxu0
  %v262 = vadd.f32 %v149, %v261
  %v263 = vpop.f32.mrb[0].mxu0
  %264 = vdwg.mxu0
  %265 = vmatprep.subr.mxu0 0.0
  %266 = vmatpush1.msra.mxu0 %v48
  %267 = vmatprep.subr.mxu0 0.0
  %268 = vmatpush1.msra.mxu0 %v49
  %269 = vmatprep.subr.mxu0 0.0
  %270 = vmatpush1.msra.mxu0 %v50
  %271 = vmatprep.subr.mxu0 0.0
  %272 = vmatpush1.msra.mxu0 %v51
  %273 = vmatprep.subr.mxu0 0.0
  %274 = vmatpush1.msra.mxu0 %v52
  %275 = vmatprep.subr.mxu0 0.0
  %276 = vmatpush1.msra.mxu0 %v53
  %277 = vmatprep.subr.mxu0 0.0
  %278 = vmatpush1.msra.mxu0 %v54
  %279 = vmatprep.subr.mxu0 0.0
  %280 = vmatpush1.msra.mxu0 %v55
  %281 = vmatprep.subr.mxu0 0.0
  %282 = vmatpush1.msra.mxu0 %v56
  %283 = vmatprep.subr.mxu0 0.0
  %284 = vmatpush1.msra.mxu0 %v57
  %285 = vmatprep.subr.mxu0 0.0
  %286 = vmatpush1.msra.mxu0 %v58
  %287 = vmatprep.subr.mxu0 0.0
  %288 = vmatpush1.msra.mxu0 %v59
  %289 = vmatprep.subr.mxu0 0.0
  %290 = vmatpush1.msra.mxu0 %v60
  %291 = vmatprep.subr.mxu0 0.0
  %292 = vmatpush1.msra.mxu0 %v61
  %293 = vmatprep.subr.mxu0 0.0
  %294 = vmatpush1.msra.mxu0 %v62
  %295 = vmatprep.subr.mxu0 0.0
  %296 = vmatpush1.msra.mxu0 %v63
  %297 = vmatprep.subr.mxu0 0.0
  %298 = vmatpush1.msra.mxu0 %v64
  %299 = vmatprep.subr.mxu0 0.0
  %300 = vmatpush1.msra.mxu0 %v65
  %301 = vmatprep.subr.mxu0 0.0
  %302 = vmatpush1.msra.mxu0 %v66
  %303 = vmatprep.subr.mxu0 0.0
  %304 = vmatpush1.msra.mxu0 %v67
  %305 = vmatprep.subr.mxu0 0.0
  %306 = vmatpush1.msra.mxu0 %v68
  %307 = vmatprep.subr.mxu0 0.0
  %308 = vmatpush1.msra.mxu0 %v69
  %309 = vmatprep.subr.mxu0 0.0
  %310 = vmatpush1.msra.mxu0 %v70
  %311 = vmatprep.subr.mxu0 0.0
  %312 = vmatpush1.msra.mxu0 %v71
  %313 = vmatprep.subr.mxu0 0.0
  %314 = vmatpush1.msra.mxu0 %v72
  %315 = vmatprep.subr.mxu0 0.0
  %316 = vmatpush1.msra.mxu0 %v73
  %317 = vmatprep.subr.mxu0 0.0
  %318 = vmatpush1.msra.mxu0 %v74
  %319 = vmatprep.subr.mxu0 0.0
  %320 = vmatpush1.msra.mxu0 %v75
  %321 = vmatprep.subr.mxu0 0.0
  %322 = vmatpush1.msra.mxu0 %v76
  %323 = vmatprep.subr.mxu0 0.0
  %324 = vmatpush1.msra.mxu0 %v77
  %325 = vmatprep.subr.mxu0 0.0
  %326 = vmatpush1.msra.mxu0 %v78
  %327 = vmatprep.subr.mxu0 0.0
  %328 = vmatpush1.msra.mxu0 %v79
  %329 = vmatprep.mubr.f32.mxu0 %v169
  %330 = vmatmul.mubr.f32.gmra.mrb[0].mxu0 %v167
  %v331 = vpop.f32.mrb[0].mxu0
  %v332 = vadd.f32 %v262, %v331
  %v333 = vpop.f32.mrb[0].mxu0
  %334 = vdwg.mxu0
  %335 = vmatprep.subr.mxu0 0.0
  %336 = vmatpush1.msra.mxu0 %v80
  %337 = vmatprep.subr.mxu0 0.0
  %338 = vmatpush1.msra.mxu0 %v81
  %339 = vmatprep.subr.mxu0 0.0
  %340 = vmatpush1.msra.mxu0 %v82
  %341 = vmatprep.subr.mxu0 0.0
  %342 = vmatpush1.msra.mxu0 %v83
  %343 = vmatprep.subr.mxu0 0.0
  %344 = vmatpush1.msra.mxu0 %v84
  %345 = vmatprep.subr.mxu0 0.0
  %346 = vmatpush1.msra.mxu0 %v85
  %347 = vmatprep.subr.mxu0 0.0
  %348 = vmatpush1.msra.mxu0 %v86
  %349 = vmatprep.subr.mxu0 0.0
  %350 = vmatpush1.msra.mxu0 %v87
  %351 = vmatprep.subr.mxu0 0.0
  %352 = vmatpush1.msra.mxu0 %v88
  %353 = vmatprep.subr.mxu0 0.0
  %354 = vmatpush1.msra.mxu0 %v89
  %355 = vmatprep.subr.mxu0 0.0
  %356 = vmatpush1.msra.mxu0 %v90
  %357 = vmatprep.subr.mxu0 0.0
  %358 = vmatpush1.msra.mxu0 %v91
  %359 = vmatprep.subr.mxu0 0.0
  %360 = vmatpush1.msra.mxu0 %v92
  %361 = vmatprep.subr.mxu0 0.0
  %362 = vmatpush1.msra.mxu0 %v93
  %363 = vmatprep.subr.mxu0 0.0
  %364 = vmatpush1.msra.mxu0 %v94
  %365 = vmatprep.subr.mxu0 0.0
  %366 = vmatpush1.msra.mxu0 %v95
  %367 = vmatprep.subr.mxu0 0.0
  %368 = vmatpush1.msra.mxu0 %v96
  %369 = vmatprep.subr.mxu0 0.0
  %370 = vmatpush1.msra.mxu0 %v97
  %371 = vmatprep.subr.mxu0 0.0
  %372 = vmatpush1.msra.mxu0 %v98
  %373 = vmatprep.subr.mxu0 0.0
  %374 = vmatpush1.msra.mxu0 %v99
  %375 = vmatprep.subr.mxu0 0.0
  %376 = vmatpush1.msra.mxu0 %v100
  %377 = vmatprep.subr.mxu0 0.0
  %378 = vmatpush1.msra.mxu0 %v101
  %379 = vmatprep.subr.mxu0 0.0
  %380 = vmatpush1.msra.mxu0 %v102
  %381 = vmatprep.subr.mxu0 0.0
  %382 = vmatpush1.msra.mxu0 %v103
  %383 = vmatprep.subr.mxu0 0.0
  %384 = vmatpush1.msra.mxu0 %v104
  %385 = vmatprep.subr.mxu0 0.0
  %386 = vmatpush1.msra.mxu0 %v105
  %387 = vmatprep.subr.mxu0 0.0
  %388 = vmatpush1.msra.mxu0 %v106
  %389 = vmatprep.subr.mxu0 0.0
  %390 = vmatpush1.msra.mxu0 %v107
  %391 = vmatprep.subr.mxu0 0.0
  %392 = vmatpush1.msra.mxu0 %v108
  %393 = vmatprep.subr.mxu0 0.0
  %394 = vmatpush1.msra.mxu0 %v109
  %395 = vmatprep.subr.mxu0 0.0
  %396 = vmatpush1.msra.mxu0 %v110
  %397 = vmatprep.subr.mxu0 0.0
  %398 = vmatpush1.msra.mxu0 %v111
  %399 = vmatprep.mubr.f32.mxu0 %v185
  %400 = vmatmul.mubr.f32.gmra.mrb[0].mxu0 %v177
  %v401 = vpop.f32.mrb[0].mxu0
  %v402 = vadd.f32 %v332, %v401
  %v403 = vpop.f32.mrb[0].mxu0
  %404 = vdwg.mxu0
  %405 = vmatprep.subr.mxu0 0.0
  %406 = vmatpush1.msra.mxu0 %v112
  %407 = vmatprep.subr.mxu0 0.0
  %408 = vmatpush1.msra.mxu0 %v113
  %409 = vmatprep.subr.mxu0 0.0
  %410 = vmatpush1.msra.mxu0 %v114
  %411 = vmatprep.subr.mxu0 0.0
  %412 = vmatpush1.msra.mxu0 %v115
  %413 = vmatprep.subr.mxu0 0.0
  %414 = vmatpush1.msra.mxu0 %v116
  %415 = vmatprep.subr.mxu0 0.0
  %416 = vmatpush1.msra.mxu0 %v117
  %417 = vmatprep.subr.mxu0 0.0
  %418 = vmatpush1.msra.mxu0 %v118
  %419 = vmatprep.subr.mxu0 0.0
  %420 = vmatpush1.msra.mxu0 %v119
  %421 = vmatprep.subr.mxu0 0.0
  %422 = vmatpush1.msra.mxu0 %v120
  %423 = vmatprep.subr.mxu0 0.0
  %424 = vmatpush1.msra.mxu0 %v121
  %425 = vmatprep.subr.mxu0 0.0
  %426 = vmatpush1.msra.mxu0 %v122
  %427 = vmatprep.subr.mxu0 0.0
  %428 = vmatpush1.msra.mxu0 %v123
  %429 = vmatprep.subr.mxu0 0.0
  %430 = vmatpush1.msra.mxu0 %v124
  %431 = vmatprep.subr.mxu0 0.0
  %432 = vmatpush1.msra.mxu0 %v125
  %433 = vmatprep.subr.mxu0 0.0
  %434 = vmatpush1.msra.mxu0 %v126
  %435 = vmatprep.subr.mxu0 0.0
  %436 = vmatpush1.msra.mxu0 %v127
  %437 = vmatprep.subr.mxu0 0.0
  %438 = vmatpush1.msra.mxu0 %v128
  %439 = vmatprep.subr.mxu0 0.0
  %440 = vmatpush1.msra.mxu0 %v129
  %441 = vmatprep.subr.mxu0 0.0
  %442 = vmatpush1.msra.mxu0 %v130
  %443 = vmatprep.subr.mxu0 0.0
  %444 = vmatpush1.msra.mxu0 %v131
  %445 = vmatprep.subr.mxu0 0.0
  %446 = vmatpush1.msra.mxu0 %v132
  %447 = vmatprep.subr.mxu0 0.0
  %448 = vmatpush1.msra.mxu0 %v133
  %449 = vmatprep.subr.mxu0 0.0
  %450 = vmatpush1.msra.mxu0 %v134
  %451 = vmatprep.subr.mxu0 0.0
  %452 = vmatpush1.msra.mxu0 %v135
  %453 = vmatprep.subr.mxu0 0.0
  %454 = vmatpush1.msra.mxu0 %v136
  %455 = vmatprep.subr.mxu0 0.0
  %456 = vmatpush1.msra.mxu0 %v137
  %457 = vmatprep.subr.mxu0 0.0
  %458 = vmatpush1.msra.mxu0 %v138
  %459 = vmatprep.subr.mxu0 0.0
  %460 = vmatpush1.msra.mxu0 %v139
  %461 = vmatprep.subr.mxu0 0.0
  %462 = vmatpush1.msra.mxu0 %v140
  %463 = vmatprep.subr.mxu0 0.0
  %464 = vmatpush1.msra.mxu0 %v141
  %465 = vmatprep.subr.mxu0 0.0
  %466 = vmatpush1.msra.mxu0 %v142
  %467 = vmatprep.subr.mxu0 0.0
  %468 = vmatpush1.msra.mxu0 %v143
  %469 = vmatprep.mubr.f32.mxu0 %v186
  %470 = vmatmul.mubr.f32.gmra.mrb[0].mxu0 %v184
  %v471 = vpop.f32.mrb[0].mxu0
  %v472 = vadd.f32 %v402, %v471
  %v473 = vpop.f32.mrb[0].mxu0
  %474 = vdwg.mxu0
  %vm475 = vcmask 254976
  %476 = vst.msk [vmem:[%s3] sm:$0x3] %vm475, %v472
  // Predicated region
  $region14: #{convnet_forward.1} parent=0 // pred_check
    _
  $region15: #{convnet_forward.1} parent=0 // pred_check_branch
    %478 = sbr.rel (0) target = $region17
  $region16: #{convnet_forward.1} parent=0 // pred_region
    _
  $region17: #{convnet_forward.1} parent=0 // pred_fallthru
    _
  // Predicated region
  $region18: #{convnet_forward.1} parent=0 // pred_check
    _
  $region19: #{convnet_forward.1} parent=0 // pred_check_branch
    %480 = sbr.rel (0) target = $region21
  $region20: #{convnet_forward.1} parent=0 // pred_region
    _
  $region21: #{convnet_forward.1} parent=0 // pred_fallthru
    _

</llo_original>
